<compile_context>
chip_gen: v5e
topology: v5e:2x2
jax: 0.10.0
libtpu: 0.0.40
codegen_flags: <defaults>
</compile_context>

<pallas_src>
import math
import jax
import jax.numpy as jnp
from jax.experimental import pallas as pl
from jax.experimental.pallas import tpu as pltpu

D_MODEL = 4
NHEAD = 2
DIM_FF = 16
HEAD_DIM = D_MODEL // NHEAD
LN_EPS = 1e-5


def _layer_norm(x, w, b):
    # x: (N, D), w/b: (1, D); biased variance like torch.nn.LayerNorm
    mean = jnp.mean(x, axis=-1, keepdims=True)
    var = jnp.mean((x - mean) ** 2, axis=-1, keepdims=True)
    return (x - mean) * jax.lax.rsqrt(var + LN_EPS) * w + b


def encoder_layer_kernel(x_ref, mask_ref,
                         in_w_ref, in_b_ref, out_w_ref, out_b_ref,
                         lin1_w_ref, lin1_b_ref, lin2_w_ref, lin2_b_ref,
                         ln1_w_ref, ln1_b_ref, ln2_w_ref, ln2_b_ref,
                         o_ref):
    # Single invocation, whole arrays in VMEM.
    #   x_ref:    (S, B*D)  -- PyTorch (S, B, D) viewed with batches lane-packed
    #   mask_ref: (B, S)    -- additive key-padding mask (0 or -1e9)
    #   weights:  full arrays
    D = D_MODEL
    S = x_ref.shape[0]
    B = x_ref.shape[1] // D

    x_all = x_ref[...]
    if x_all.dtype != jnp.float32:
        x_all = x_all.astype(jnp.float32)

    # Hoist weight transposes / parameter loads ONCE (loops below are
    # Python-unrolled; JAX will not CSE repeated transposes/broadcasts).
    in_wt = in_w_ref[...].T        # (D, 3D)
    out_wt = out_w_ref[...].T      # (D, D)
    l1_wt = lin1_w_ref[...].T      # (D, FF)
    l2_wt = lin2_w_ref[...].T      # (FF, D)
    in_b = in_b_ref[...]           # (1, 3D)
    out_b = out_b_ref[...]         # (1, D)
    l1_b = lin1_b_ref[...]         # (1, FF)
    l2_b = lin2_b_ref[...]         # (1, D)
    mask = mask_ref[...]           # (B, S)

    # Gather all batch rows into one (B*S, D) slab (b-major, s-minor) so the
    # row-wise ops (QKV, LayerNorm, FF) run once over every token.
    x_rows = jnp.concatenate(
        [x_all[:, b * D:(b + 1) * D] for b in range(B)], axis=0)        # (B*S, D)

    # ---- fused QKV projection for all batches ----
    qkv = jnp.dot(x_rows, in_wt, preferred_element_type=jnp.float32) + in_b  # (B*S, 3D)

    # ---- multi-head self attention (q = k = v = x), per (batch, head) ----
    scale = 1.0 / math.sqrt(HEAD_DIM)
    attn_rows = []
    for b in range(B):                           # static, B = 2
        rows = slice(b * S, (b + 1) * S)
        q = qkv[rows, 0:D]
        k = qkv[rows, D:2 * D]
        v = qkv[rows, 2 * D:3 * D]
        mask_b = mask[b:b + 1, :]                # (1, S) key-padding mask
        acc = None
        for h in range(NHEAD):                   # static, NHEAD = 2
            sl = slice(h * HEAD_DIM, (h + 1) * HEAD_DIM)
            qh, kh, vh = q[:, sl], k[:, sl], v[:, sl]
            s = jnp.dot(qh, kh.T, preferred_element_type=jnp.float32) * scale
            s = s + mask_b
            s = s - jnp.max(s, axis=-1, keepdims=True)
            p = jnp.exp(s)
            p = p / jnp.sum(p, axis=-1, keepdims=True)
            oh = jnp.dot(p, vh, preferred_element_type=jnp.float32)     # (S, hd)
            # Fold out_proj in per head: concat(heads) @ W_o.T == sum_h oh @ W_o[:,sl].T
            contrib = jnp.dot(oh, out_wt[sl, :],
                              preferred_element_type=jnp.float32)       # (S, D)
            acc = contrib if acc is None else acc + contrib
        attn_rows.append(acc)
    attn = jnp.concatenate(attn_rows, axis=0) + out_b                   # (B*S, D)

    # ---- residual + LayerNorm 1 (all tokens at once) ----
    y1 = _layer_norm(x_rows + attn, ln1_w_ref[...], ln1_b_ref[...])

    # ---- feedforward (ReLU), dropout = 0 is a no-op ----
    h1 = jnp.maximum(jnp.dot(y1, l1_wt, preferred_element_type=jnp.float32) + l1_b, 0.0)
    h2 = jnp.dot(h1, l2_wt, preferred_element_type=jnp.float32) + l2_b

    # ---- residual + LayerNorm 2 ----
    y2 = _layer_norm(y1 + h2, ln2_w_ref[...], ln2_b_ref[...])           # (B*S, D)

    # Reassemble lane-packed (S, B*D) layout and store the whole block once.
    out = jnp.concatenate([y2[b * S:(b + 1) * S, :] for b in range(B)], axis=1)
    o_ref[...] = out.astype(o_ref.dtype)


def init_params(key):
    """Deterministic synthetic parameters matching nn.TransformerEncoderLayer(4,2,16)."""
    ks = jax.random.split(key, 6)

    def unif(k, shape, fan_in):
        bound = 1.0 / math.sqrt(fan_in)
        return jax.random.uniform(k, shape, jnp.float32, -bound, bound)

    D, FF = D_MODEL, DIM_FF
    return {
        # MultiheadAttention (in_proj / out_proj biases are zero-init in PyTorch)
        "in_w": unif(ks[0], (3 * D, D), D),
        "in_b": jnp.zeros((1, 3 * D), jnp.float32),
        "out_w": unif(ks[1], (D, D), D),
        "out_b": jnp.zeros((1, D), jnp.float32),
        # Feedforward
        "lin1_w": unif(ks[2], (FF, D), D),
        "lin1_b": unif(ks[3], (1, FF), D),
        "lin2_w": unif(ks[4], (D, FF), FF),
        "lin2_b": unif(ks[5], (1, D), FF),
        # LayerNorms
        "ln1_w": jnp.ones((1, D), jnp.float32),
        "ln1_b": jnp.zeros((1, D), jnp.float32),
        "ln2_w": jnp.ones((1, D), jnp.float32),
        "ln2_b": jnp.zeros((1, D), jnp.float32),
    }


def net_transformer_forward(params, encoder_input, src_key_padding_mask=None):
    """encoder_input: (S, B, D) float32 (PyTorch seq-first layout).
    src_key_padding_mask: optional bool (B, S), True == padded/ignored.
    Returns (S, B, D)."""
    S, B, D = encoder_input.shape
    assert D == D_MODEL

    # Free, contiguous reshape (no transpose, no extra HBM pass): (S, B, D) -> (S, B*D).
    x2d = encoder_input.reshape(S, B * D)

    if src_key_padding_mask is None:
        add_mask = jnp.zeros((B, S), jnp.float32)
    else:
        add_mask = jnp.where(src_key_padding_mask, -1e9, 0.0).astype(jnp.float32)

    # Advisory cost estimate (helps XLA schedule around the custom call).
    FF, H, HD = DIM_FF, NHEAD, HEAD_DIM
    flops = (2 * B * S * D * 3 * D              # QKV
             + 2 * B * H * S * S * HD * 2       # scores + p@v
             + 2 * B * H * S * HD * D           # out_proj (per-head accumulation)
             + 2 * B * S * D * FF * 2)          # feedforward
    transcendentals = B * H * S * S + 2 * B * S
    weight_elems = (3 * D * D + 3 * D + D * D + D + D * FF + FF + FF * D + D + 4 * D)
    bytes_accessed = 4 * (2 * S * B * D + B * S + weight_elems)

    vmem_full = pl.BlockSpec(memory_space=pltpu.MemorySpace.VMEM)  # whole array in VMEM
    out2d = pl.pallas_call(
        encoder_layer_kernel,
        out_shape=jax.ShapeDtypeStruct((S, B * D), encoder_input.dtype),
        in_specs=[vmem_full] * 14,
        out_specs=vmem_full,
        cost_estimate=pl.CostEstimate(flops=flops,
                                      transcendentals=transcendentals,
                                      bytes_accessed=bytes_accessed),
    )(x2d, add_mask,
      params["in_w"], params["in_b"], params["out_w"], params["out_b"],
      params["lin1_w"], params["lin1_b"], params["lin2_w"], params["lin2_b"],
      params["ln1_w"], params["ln1_b"], params["ln2_w"], params["ln2_b"])

    # Free reshape back to the PyTorch (S, B, D) layout.
    return out2d.reshape(S, B, D)


if __name__ == "__main__":
    key = jax.random.PRNGKey(0)
    k_in, k_par = jax.random.split(key)

    S, B = 8, 2
    encoder_input = jax.random.normal(k_in, (S, B, D_MODEL), jnp.float32)
    # Example key-padding mask: last position of batch 1 is padded.
    src_key_padding_mask = jnp.zeros((B, S), jnp.bool_).at[1, S - 1].set(True)

    params = init_params(k_par)

    out = net_transformer_forward(params, encoder_input, src_key_padding_mask)
    out = jax.block_until_ready(out)
    assert out.shape == (S, B, D_MODEL)
    print("KERNEL_OK")
</pallas_src>

<mosaic_0001>
module attributes {stable_mosaic.version = 11 : i64} {
  func.func @encoder_layer_kernel(%arg0: memref<8x8xf32, #tpu.memory_space<vmem>>, %arg1: memref<2x8xf32, #tpu.memory_space<vmem>>, %arg2: memref<12x4xf32, #tpu.memory_space<vmem>>, %arg3: memref<1x12xf32, #tpu.memory_space<vmem>>, %arg4: memref<4x4xf32, #tpu.memory_space<vmem>>, %arg5: memref<1x4xf32, #tpu.memory_space<vmem>>, %arg6: memref<16x4xf32, #tpu.memory_space<vmem>>, %arg7: memref<1x16xf32, #tpu.memory_space<vmem>>, %arg8: memref<4x16xf32, #tpu.memory_space<vmem>>, %arg9: memref<1x4xf32, #tpu.memory_space<vmem>>, %arg10: memref<1x4xf32, #tpu.memory_space<vmem>>, %arg11: memref<1x4xf32, #tpu.memory_space<vmem>>, %arg12: memref<1x4xf32, #tpu.memory_space<vmem>>, %arg13: memref<1x4xf32, #tpu.memory_space<vmem>>, %arg14: memref<8x8xf32, #tpu.memory_space<vmem>>) attributes {dimension_semantics = [], scalar_prefetch = 0 : i64, scratch_operands = 0 : i64, tpu.core_type = #tpu.core_type<tc>} {
    %c0 = arith.constant 0 : index
    %c0_0 = arith.constant 0 : index
    %0 = vector.load %arg0[%c0, %c0_0] : memref<8x8xf32, #tpu.memory_space<vmem>>, vector<8x8xf32>
    %c0_1 = arith.constant 0 : index
    %c0_2 = arith.constant 0 : index
    %1 = vector.load %arg2[%c0_1, %c0_2] : memref<12x4xf32, #tpu.memory_space<vmem>>, vector<12x4xf32>
    %2 = tpu.transpose %1, [1, 0] : vector<12x4xf32> -> vector<4x12xf32>
    %c0_3 = arith.constant 0 : index
    %c0_4 = arith.constant 0 : index
    %3 = vector.load %arg4[%c0_3, %c0_4] : memref<4x4xf32, #tpu.memory_space<vmem>>, vector<4x4xf32>
    %4 = tpu.transpose %3, [1, 0] : vector<4x4xf32> -> vector<4x4xf32>
    %c0_5 = arith.constant 0 : index
    %c0_6 = arith.constant 0 : index
    %5 = vector.load %arg6[%c0_5, %c0_6] : memref<16x4xf32, #tpu.memory_space<vmem>>, vector<16x4xf32>
    %6 = tpu.transpose %5, [1, 0] : vector<16x4xf32> -> vector<4x16xf32>
    %c0_7 = arith.constant 0 : index
    %c0_8 = arith.constant 0 : index
    %7 = vector.load %arg8[%c0_7, %c0_8] : memref<4x16xf32, #tpu.memory_space<vmem>>, vector<4x16xf32>
    %8 = tpu.transpose %7, [1, 0] : vector<4x16xf32> -> vector<16x4xf32>
    %c0_9 = arith.constant 0 : index
    %c0_10 = arith.constant 0 : index
    %9 = vector.load %arg3[%c0_9, %c0_10] : memref<1x12xf32, #tpu.memory_space<vmem>>, vector<1x12xf32>
    %c0_11 = arith.constant 0 : index
    %c0_12 = arith.constant 0 : index
    %10 = vector.load %arg5[%c0_11, %c0_12] : memref<1x4xf32, #tpu.memory_space<vmem>>, vector<1x4xf32>
    %c0_13 = arith.constant 0 : index
    %c0_14 = arith.constant 0 : index
    %11 = vector.load %arg7[%c0_13, %c0_14] : memref<1x16xf32, #tpu.memory_space<vmem>>, vector<1x16xf32>
    %c0_15 = arith.constant 0 : index
    %c0_16 = arith.constant 0 : index
    %12 = vector.load %arg9[%c0_15, %c0_16] : memref<1x4xf32, #tpu.memory_space<vmem>>, vector<1x4xf32>
    %c0_17 = arith.constant 0 : index
    %c0_18 = arith.constant 0 : index
    %13 = vector.load %arg1[%c0_17, %c0_18] : memref<2x8xf32, #tpu.memory_space<vmem>>, vector<2x8xf32>
    %14 = vector.extract_strided_slice %0 {offsets = [0, 0], sizes = [8, 4], strides = [1, 1]} : vector<8x8xf32> to vector<8x4xf32>
    %15 = vector.extract_strided_slice %0 {offsets = [0, 4], sizes = [8, 4], strides = [1, 1]} : vector<8x8xf32> to vector<8x4xf32>
    %16 = tpu.concatenate %14, %15 in 0 : vector<8x4xf32>, vector<8x4xf32> -> vector<16x4xf32>
    %cst = arith.constant dense<0.000000e+00> : vector<16x12xf32>
    %17 = tpu.matmul %16, %2, %cst {dimension_numbers = #tpu.dot_dimension_numbers<[1], [0], [0], [1], [0, 0, 1, 1], [], []>} : vector<16x4xf32>, vector<4x12xf32>, vector<16x12xf32> -> vector<16x12xf32>
    %18 = vector.broadcast %9 : vector<1x12xf32> to vector<16x12xf32>
    %19 = arith.addf %17, %18 : vector<16x12xf32>
    %20 = vector.extract_strided_slice %19 {offsets = [0, 0], sizes = [8, 4], strides = [1, 1]} : vector<16x12xf32> to vector<8x4xf32>
    %21 = vector.extract_strided_slice %19 {offsets = [0, 4], sizes = [8, 4], strides = [1, 1]} : vector<16x12xf32> to vector<8x4xf32>
    %22 = vector.extract_strided_slice %19 {offsets = [0, 8], sizes = [8, 4], strides = [1, 1]} : vector<16x12xf32> to vector<8x4xf32>
    %23 = vector.extract_strided_slice %13 {offsets = [0, 0], sizes = [1, 8], strides = [1, 1]} : vector<2x8xf32> to vector<1x8xf32>
    %24 = vector.extract_strided_slice %20 {offsets = [0, 0], sizes = [8, 2], strides = [1, 1]} : vector<8x4xf32> to vector<8x2xf32>
    %25 = vector.extract_strided_slice %21 {offsets = [0, 0], sizes = [8, 2], strides = [1, 1]} : vector<8x4xf32> to vector<8x2xf32>
    %26 = vector.extract_strided_slice %22 {offsets = [0, 0], sizes = [8, 2], strides = [1, 1]} : vector<8x4xf32> to vector<8x2xf32>
    %27 = tpu.transpose %25, [1, 0] : vector<8x2xf32> -> vector<2x8xf32>
    %cst_19 = arith.constant dense<0.000000e+00> : vector<8x8xf32>
    %28 = tpu.matmul %24, %27, %cst_19 {dimension_numbers = #tpu.dot_dimension_numbers<[1], [0], [0], [1], [0, 0, 1, 1], [], []>} : vector<8x2xf32>, vector<2x8xf32>, vector<8x8xf32> -> vector<8x8xf32>
    %cst_20 = arith.constant 0.707106769 : f32
    %29 = vector.broadcast %cst_20 : f32 to vector<8x8xf32>
    %30 = arith.mulf %28, %29 : vector<8x8xf32>
    %31 = vector.broadcast %23 : vector<1x8xf32> to vector<8x8xf32>
    %32 = arith.addf %30, %31 : vector<8x8xf32>
    %cst_21 = arith.constant dense<0xFF800000> : vector<8xf32>
    %33 = vector.multi_reduction <maximumf>, %32, %cst_21 [1] : vector<8x8xf32> to vector<8xf32>
    %34 = vector.shape_cast %33 : vector<8xf32> to vector<8x1xf32>
    %35 = vector.broadcast %34 : vector<8x1xf32> to vector<8x8xf32>
    %36 = arith.subf %32, %35 : vector<8x8xf32>
    %37 = math.exp %36 : vector<8x8xf32>
    %cst_22 = arith.constant dense<0.000000e+00> : vector<8xf32>
    %38 = vector.multi_reduction <add>, %37, %cst_22 [1] : vector<8x8xf32> to vector<8xf32>
    %39 = vector.shape_cast %38 : vector<8xf32> to vector<8x1xf32>
    %40 = vector.broadcast %39 : vector<8x1xf32> to vector<8x8xf32>
    %41 = arith.divf %37, %40 : vector<8x8xf32>
    %cst_23 = arith.constant dense<0.000000e+00> : vector<8x2xf32>
    %42 = tpu.matmul %41, %26, %cst_23 {dimension_numbers = #tpu.dot_dimension_numbers<[1], [0], [0], [1], [0, 0, 1, 1], [], []>} : vector<8x8xf32>, vector<8x2xf32>, vector<8x2xf32> -> vector<8x2xf32>
    %43 = vector.extract_strided_slice %4 {offsets = [0, 0], sizes = [2, 4], strides = [1, 1]} : vector<4x4xf32> to vector<2x4xf32>
    %cst_24 = arith.constant dense<0.000000e+00> : vector<8x4xf32>
    %44 = tpu.matmul %42, %43, %cst_24 {dimension_numbers = #tpu.dot_dimension_numbers<[1], [0], [0], [1], [0, 0, 1, 1], [], []>} : vector<8x2xf32>, vector<2x4xf32>, vector<8x4xf32> -> vector<8x4xf32>
    %45 = vector.extract_strided_slice %20 {offsets = [0, 2], sizes = [8, 2], strides = [1, 1]} : vector<8x4xf32> to vector<8x2xf32>
    %46 = vector.extract_strided_slice %21 {offsets = [0, 2], sizes = [8, 2], strides = [1, 1]} : vector<8x4xf32> to vector<8x2xf32>
    %47 = vector.extract_strided_slice %22 {offsets = [0, 2], sizes = [8, 2], strides = [1, 1]} : vector<8x4xf32> to vector<8x2xf32>
    %48 = tpu.transpose %46, [1, 0] : vector<8x2xf32> -> vector<2x8xf32>
    %cst_25 = arith.constant dense<0.000000e+00> : vector<8x8xf32>
    %49 = tpu.matmul %45, %48, %cst_25 {dimension_numbers = #tpu.dot_dimension_numbers<[1], [0], [0], [1], [0, 0, 1, 1], [], []>} : vector<8x2xf32>, vector<2x8xf32>, vector<8x8xf32> -> vector<8x8xf32>
    %cst_26 = arith.constant 0.707106769 : f32
    %50 = vector.broadcast %cst_26 : f32 to vector<8x8xf32>
    %51 = arith.mulf %49, %50 : vector<8x8xf32>
    %52 = vector.broadcast %23 : vector<1x8xf32> to vector<8x8xf32>
    %53 = arith.addf %51, %52 : vector<8x8xf32>
    %cst_27 = arith.constant dense<0xFF800000> : vector<8xf32>
    %54 = vector.multi_reduction <maximumf>, %53, %cst_27 [1] : vector<8x8xf32> to vector<8xf32>
    %55 = vector.shape_cast %54 : vector<8xf32> to vector<8x1xf32>
    %56 = vector.broadcast %55 : vector<8x1xf32> to vector<8x8xf32>
    %57 = arith.subf %53, %56 : vector<8x8xf32>
    %58 = math.exp %57 : vector<8x8xf32>
    %cst_28 = arith.constant dense<0.000000e+00> : vector<8xf32>
    %59 = vector.multi_reduction <add>, %58, %cst_28 [1] : vector<8x8xf32> to vector<8xf32>
    %60 = vector.shape_cast %59 : vector<8xf32> to vector<8x1xf32>
    %61 = vector.broadcast %60 : vector<8x1xf32> to vector<8x8xf32>
    %62 = arith.divf %58, %61 : vector<8x8xf32>
    %cst_29 = arith.constant dense<0.000000e+00> : vector<8x2xf32>
    %63 = tpu.matmul %62, %47, %cst_29 {dimension_numbers = #tpu.dot_dimension_numbers<[1], [0], [0], [1], [0, 0, 1, 1], [], []>} : vector<8x8xf32>, vector<8x2xf32>, vector<8x2xf32> -> vector<8x2xf32>
    %64 = vector.extract_strided_slice %4 {offsets = [2, 0], sizes = [2, 4], strides = [1, 1]} : vector<4x4xf32> to vector<2x4xf32>
    %cst_30 = arith.constant dense<0.000000e+00> : vector<8x4xf32>
    %65 = tpu.matmul %63, %64, %cst_30 {dimension_numbers = #tpu.dot_dimension_numbers<[1], [0], [0], [1], [0, 0, 1, 1], [], []>} : vector<8x2xf32>, vector<2x4xf32>, vector<8x4xf32> -> vector<8x4xf32>
    %66 = arith.addf %44, %65 : vector<8x4xf32>
    %67 = vector.extract_strided_slice %19 {offsets = [8, 0], sizes = [8, 4], strides = [1, 1]} : vector<16x12xf32> to vector<8x4xf32>
    %68 = vector.extract_strided_slice %19 {offsets = [8, 4], sizes = [8, 4], strides = [1, 1]} : vector<16x12xf32> to vector<8x4xf32>
    %69 = vector.extract_strided_slice %19 {offsets = [8, 8], sizes = [8, 4], strides = [1, 1]} : vector<16x12xf32> to vector<8x4xf32>
    %70 = vector.extract_strided_slice %13 {offsets = [1, 0], sizes = [1, 8], strides = [1, 1]} : vector<2x8xf32> to vector<1x8xf32>
    %71 = vector.extract_strided_slice %67 {offsets = [0, 0], sizes = [8, 2], strides = [1, 1]} : vector<8x4xf32> to vector<8x2xf32>
    %72 = vector.extract_strided_slice %68 {offsets = [0, 0], sizes = [8, 2], strides = [1, 1]} : vector<8x4xf32> to vector<8x2xf32>
    %73 = vector.extract_strided_slice %69 {offsets = [0, 0], sizes = [8, 2], strides = [1, 1]} : vector<8x4xf32> to vector<8x2xf32>
    %74 = tpu.transpose %72, [1, 0] : vector<8x2xf32> -> vector<2x8xf32>
    %cst_31 = arith.constant dense<0.000000e+00> : vector<8x8xf32>
    %75 = tpu.matmul %71, %74, %cst_31 {dimension_numbers = #tpu.dot_dimension_numbers<[1], [0], [0], [1], [0, 0, 1, 1], [], []>} : vector<8x2xf32>, vector<2x8xf32>, vector<8x8xf32> -> vector<8x8xf32>
    %cst_32 = arith.constant 0.707106769 : f32
    %76 = vector.broadcast %cst_32 : f32 to vector<8x8xf32>
    %77 = arith.mulf %75, %76 : vector<8x8xf32>
    %78 = vector.broadcast %70 : vector<1x8xf32> to vector<8x8xf32>
    %79 = arith.addf %77, %78 : vector<8x8xf32>
    %cst_33 = arith.constant dense<0xFF800000> : vector<8xf32>
    %80 = vector.multi_reduction <maximumf>, %79, %cst_33 [1] : vector<8x8xf32> to vector<8xf32>
    %81 = vector.shape_cast %80 : vector<8xf32> to vector<8x1xf32>
    %82 = vector.broadcast %81 : vector<8x1xf32> to vector<8x8xf32>
    %83 = arith.subf %79, %82 : vector<8x8xf32>
    %84 = math.exp %83 : vector<8x8xf32>
    %cst_34 = arith.constant dense<0.000000e+00> : vector<8xf32>
    %85 = vector.multi_reduction <add>, %84, %cst_34 [1] : vector<8x8xf32> to vector<8xf32>
    %86 = vector.shape_cast %85 : vector<8xf32> to vector<8x1xf32>
    %87 = vector.broadcast %86 : vector<8x1xf32> to vector<8x8xf32>
    %88 = arith.divf %84, %87 : vector<8x8xf32>
    %cst_35 = arith.constant dense<0.000000e+00> : vector<8x2xf32>
    %89 = tpu.matmul %88, %73, %cst_35 {dimension_numbers = #tpu.dot_dimension_numbers<[1], [0], [0], [1], [0, 0, 1, 1], [], []>} : vector<8x8xf32>, vector<8x2xf32>, vector<8x2xf32> -> vector<8x2xf32>
    %90 = vector.extract_strided_slice %4 {offsets = [0, 0], sizes = [2, 4], strides = [1, 1]} : vector<4x4xf32> to vector<2x4xf32>
    %cst_36 = arith.constant dense<0.000000e+00> : vector<8x4xf32>
    %91 = tpu.matmul %89, %90, %cst_36 {dimension_numbers = #tpu.dot_dimension_numbers<[1], [0], [0], [1], [0, 0, 1, 1], [], []>} : vector<8x2xf32>, vector<2x4xf32>, vector<8x4xf32> -> vector<8x4xf32>
    %92 = vector.extract_strided_slice %67 {offsets = [0, 2], sizes = [8, 2], strides = [1, 1]} : vector<8x4xf32> to vector<8x2xf32>
    %93 = vector.extract_strided_slice %68 {offsets = [0, 2], sizes = [8, 2], strides = [1, 1]} : vector<8x4xf32> to vector<8x2xf32>
    %94 = vector.extract_strided_slice %69 {offsets = [0, 2], sizes = [8, 2], strides = [1, 1]} : vector<8x4xf32> to vector<8x2xf32>
    %95 = tpu.transpose %93, [1, 0] : vector<8x2xf32> -> vector<2x8xf32>
    %cst_37 = arith.constant dense<0.000000e+00> : vector<8x8xf32>
    %96 = tpu.matmul %92, %95, %cst_37 {dimension_numbers = #tpu.dot_dimension_numbers<[1], [0], [0], [1], [0, 0, 1, 1], [], []>} : vector<8x2xf32>, vector<2x8xf32>, vector<8x8xf32> -> vector<8x8xf32>
    %cst_38 = arith.constant 0.707106769 : f32
    %97 = vector.broadcast %cst_38 : f32 to vector<8x8xf32>
    %98 = arith.mulf %96, %97 : vector<8x8xf32>
    %99 = vector.broadcast %70 : vector<1x8xf32> to vector<8x8xf32>
    %100 = arith.addf %98, %99 : vector<8x8xf32>
    %cst_39 = arith.constant dense<0xFF800000> : vector<8xf32>
    %101 = vector.multi_reduction <maximumf>, %100, %cst_39 [1] : vector<8x8xf32> to vector<8xf32>
    %102 = vector.shape_cast %101 : vector<8xf32> to vector<8x1xf32>
    %103 = vector.broadcast %102 : vector<8x1xf32> to vector<8x8xf32>
    %104 = arith.subf %100, %103 : vector<8x8xf32>
    %105 = math.exp %104 : vector<8x8xf32>
    %cst_40 = arith.constant dense<0.000000e+00> : vector<8xf32>
    %106 = vector.multi_reduction <add>, %105, %cst_40 [1] : vector<8x8xf32> to vector<8xf32>
    %107 = vector.shape_cast %106 : vector<8xf32> to vector<8x1xf32>
    %108 = vector.broadcast %107 : vector<8x1xf32> to vector<8x8xf32>
    %109 = arith.divf %105, %108 : vector<8x8xf32>
    %cst_41 = arith.constant dense<0.000000e+00> : vector<8x2xf32>
    %110 = tpu.matmul %109, %94, %cst_41 {dimension_numbers = #tpu.dot_dimension_numbers<[1], [0], [0], [1], [0, 0, 1, 1], [], []>} : vector<8x8xf32>, vector<8x2xf32>, vector<8x2xf32> -> vector<8x2xf32>
    %111 = vector.extract_strided_slice %4 {offsets = [2, 0], sizes = [2, 4], strides = [1, 1]} : vector<4x4xf32> to vector<2x4xf32>
    %cst_42 = arith.constant dense<0.000000e+00> : vector<8x4xf32>
    %112 = tpu.matmul %110, %111, %cst_42 {dimension_numbers = #tpu.dot_dimension_numbers<[1], [0], [0], [1], [0, 0, 1, 1], [], []>} : vector<8x2xf32>, vector<2x4xf32>, vector<8x4xf32> -> vector<8x4xf32>
    %113 = arith.addf %91, %112 : vector<8x4xf32>
    %114 = tpu.concatenate %66, %113 in 0 : vector<8x4xf32>, vector<8x4xf32> -> vector<16x4xf32>
    %115 = vector.broadcast %10 : vector<1x4xf32> to vector<16x4xf32>
    %116 = arith.addf %114, %115 : vector<16x4xf32>
    %117 = arith.addf %16, %116 : vector<16x4xf32>
    %c0_43 = arith.constant 0 : index
    %c0_44 = arith.constant 0 : index
    %118 = vector.load %arg10[%c0_43, %c0_44] : memref<1x4xf32, #tpu.memory_space<vmem>>, vector<1x4xf32>
    %c0_45 = arith.constant 0 : index
    %c0_46 = arith.constant 0 : index
    %119 = vector.load %arg11[%c0_45, %c0_46] : memref<1x4xf32, #tpu.memory_space<vmem>>, vector<1x4xf32>
    %cst_47 = arith.constant dense<0.000000e+00> : vector<16xf32>
    %120 = vector.multi_reduction <add>, %117, %cst_47 [1] : vector<16x4xf32> to vector<16xf32>
    %121 = vector.shape_cast %120 : vector<16xf32> to vector<16x1xf32>
    %cst_48 = arith.constant 4.000000e+00 : f32
    %122 = vector.broadcast %cst_48 : f32 to vector<16x1xf32>
    %123 = arith.divf %121, %122 : vector<16x1xf32>
    %124 = vector.broadcast %123 : vector<16x1xf32> to vector<16x4xf32>
    %125 = arith.subf %117, %124 : vector<16x4xf32>
    %126 = arith.mulf %125, %125 : vector<16x4xf32>
    %cst_49 = arith.constant dense<0.000000e+00> : vector<16xf32>
    %127 = vector.multi_reduction <add>, %126, %cst_49 [1] : vector<16x4xf32> to vector<16xf32>
    %128 = vector.shape_cast %127 : vector<16xf32> to vector<16x1xf32>
    %cst_50 = arith.constant 4.000000e+00 : f32
    %129 = vector.broadcast %cst_50 : f32 to vector<16x1xf32>
    %130 = arith.divf %128, %129 : vector<16x1xf32>
    %131 = vector.broadcast %123 : vector<16x1xf32> to vector<16x4xf32>
    %132 = arith.subf %117, %131 : vector<16x4xf32>
    %cst_51 = arith.constant 9.99999974E-6 : f32
    %133 = vector.broadcast %cst_51 : f32 to vector<16x1xf32>
    %134 = arith.addf %130, %133 : vector<16x1xf32>
    %135 = math.rsqrt %134 : vector<16x1xf32>
    %136 = vector.broadcast %135 : vector<16x1xf32> to vector<16x4xf32>
    %137 = arith.mulf %132, %136 : vector<16x4xf32>
    %138 = vector.broadcast %118 : vector<1x4xf32> to vector<16x4xf32>
    %139 = arith.mulf %137, %138 : vector<16x4xf32>
    %140 = vector.broadcast %119 : vector<1x4xf32> to vector<16x4xf32>
    %141 = arith.addf %139, %140 : vector<16x4xf32>
    %cst_52 = arith.constant dense<0.000000e+00> : vector<16x16xf32>
    %142 = tpu.matmul %141, %6, %cst_52 {dimension_numbers = #tpu.dot_dimension_numbers<[1], [0], [0], [1], [0, 0, 1, 1], [], []>} : vector<16x4xf32>, vector<4x16xf32>, vector<16x16xf32> -> vector<16x16xf32>
    %143 = vector.broadcast %11 : vector<1x16xf32> to vector<16x16xf32>
    %144 = arith.addf %142, %143 : vector<16x16xf32>
    %cst_53 = arith.constant 0.000000e+00 : f32
    %145 = vector.broadcast %cst_53 : f32 to vector<16x16xf32>
    %146 = arith.maximumf %144, %145 : vector<16x16xf32>
    %cst_54 = arith.constant dense<0.000000e+00> : vector<16x4xf32>
    %147 = tpu.matmul %146, %8, %cst_54 {dimension_numbers = #tpu.dot_dimension_numbers<[1], [0], [0], [1], [0, 0, 1, 1], [], []>} : vector<16x16xf32>, vector<16x4xf32>, vector<16x4xf32> -> vector<16x4xf32>
    %148 = vector.broadcast %12 : vector<1x4xf32> to vector<16x4xf32>
    %149 = arith.addf %147, %148 : vector<16x4xf32>
    %150 = arith.addf %141, %149 : vector<16x4xf32>
    %c0_55 = arith.constant 0 : index
    %c0_56 = arith.constant 0 : index
    %151 = vector.load %arg12[%c0_55, %c0_56] : memref<1x4xf32, #tpu.memory_space<vmem>>, vector<1x4xf32>
    %c0_57 = arith.constant 0 : index
    %c0_58 = arith.constant 0 : index
    %152 = vector.load %arg13[%c0_57, %c0_58] : memref<1x4xf32, #tpu.memory_space<vmem>>, vector<1x4xf32>
    %cst_59 = arith.constant dense<0.000000e+00> : vector<16xf32>
    %153 = vector.multi_reduction <add>, %150, %cst_59 [1] : vector<16x4xf32> to vector<16xf32>
    %154 = vector.shape_cast %153 : vector<16xf32> to vector<16x1xf32>
    %cst_60 = arith.constant 4.000000e+00 : f32
    %155 = vector.broadcast %cst_60 : f32 to vector<16x1xf32>
    %156 = arith.divf %154, %155 : vector<16x1xf32>
    %157 = vector.broadcast %156 : vector<16x1xf32> to vector<16x4xf32>
    %158 = arith.subf %150, %157 : vector<16x4xf32>
    %159 = arith.mulf %158, %158 : vector<16x4xf32>
    %cst_61 = arith.constant dense<0.000000e+00> : vector<16xf32>
    %160 = vector.multi_reduction <add>, %159, %cst_61 [1] : vector<16x4xf32> to vector<16xf32>
    %161 = vector.shape_cast %160 : vector<16xf32> to vector<16x1xf32>
    %cst_62 = arith.constant 4.000000e+00 : f32
    %162 = vector.broadcast %cst_62 : f32 to vector<16x1xf32>
    %163 = arith.divf %161, %162 : vector<16x1xf32>
    %164 = vector.broadcast %156 : vector<16x1xf32> to vector<16x4xf32>
    %165 = arith.subf %150, %164 : vector<16x4xf32>
    %cst_63 = arith.constant 9.99999974E-6 : f32
    %166 = vector.broadcast %cst_63 : f32 to vector<16x1xf32>
    %167 = arith.addf %163, %166 : vector<16x1xf32>
    %168 = math.rsqrt %167 : vector<16x1xf32>
    %169 = vector.broadcast %168 : vector<16x1xf32> to vector<16x4xf32>
    %170 = arith.mulf %165, %169 : vector<16x4xf32>
    %171 = vector.broadcast %151 : vector<1x4xf32> to vector<16x4xf32>
    %172 = arith.mulf %170, %171 : vector<16x4xf32>
    %173 = vector.broadcast %152 : vector<1x4xf32> to vector<16x4xf32>
    %174 = arith.addf %172, %173 : vector<16x4xf32>
    %175 = vector.extract_strided_slice %174 {offsets = [0, 0], sizes = [8, 4], strides = [1, 1]} : vector<16x4xf32> to vector<8x4xf32>
    %176 = vector.extract_strided_slice %174 {offsets = [8, 0], sizes = [8, 4], strides = [1, 1]} : vector<16x4xf32> to vector<8x4xf32>
    %177 = tpu.concatenate %175, %176 in 1 : vector<8x4xf32>, vector<8x4xf32> -> vector<8x8xf32>
    %c0_64 = arith.constant 0 : index
    %c0_65 = arith.constant 0 : index
    %178 = vector.load %arg14[%c0_64, %c0_65] : memref<8x8xf32, #tpu.memory_space<vmem>>, vector<8x8xf32>
    tpu.vector_store %arg14[%c0_64, %c0_65], %177 {strides = array<i32>} : memref<8x8xf32, #tpu.memory_space<vmem>>, vector<8x8xf32>,
    return
  }
}

</mosaic_0001>

<llo_original>
// kernel: tpu_custom_call.1
$region0: #{tpu_custom_call.1}
  #allocation0 [shape = 'u32[]', space=smem, size = 0x4, offset = 0x4, fixed_abs, tag = 'smem constant byte address 0x4 - core index']
  #allocation1 [shape = 'u32[72,128]{1,0:T(1,128)}', space=vmem, size = 0x9000, scoped, tag = 'internal scratch']
  %s0 = inlined_call_operand.vmem [shape: f32[8,8], index: 0, kind: input, shape index: {}]
  %s1 = inlined_call_operand.vmem [shape: f32[2,8], index: 1, kind: input, shape index: {}]
  %s2 = inlined_call_operand.vmem [shape: f32[12,4], index: 2, kind: input, shape index: {}]
  %s3 = inlined_call_operand.vmem [shape: f32[1,12], index: 3, kind: input, shape index: {}]
  %s4 = inlined_call_operand.vmem [shape: f32[4,4], index: 4, kind: input, shape index: {}]
  %s5 = inlined_call_operand.vmem [shape: f32[1,4], index: 5, kind: input, shape index: {}]
  %s6 = inlined_call_operand.vmem [shape: f32[16,4], index: 6, kind: input, shape index: {}]
  %s7 = inlined_call_operand.vmem [shape: f32[1,16], index: 7, kind: input, shape index: {}]
  %s8 = inlined_call_operand.vmem [shape: f32[4,16], index: 8, kind: input, shape index: {}]
  %s9 = inlined_call_operand.vmem [shape: f32[1,4], index: 9, kind: input, shape index: {}]
  %s10 = inlined_call_operand.vmem [shape: f32[1,4], index: 10, kind: input, shape index: {}]
  %s11 = inlined_call_operand.vmem [shape: f32[1,4], index: 11, kind: input, shape index: {}]
  %s12 = inlined_call_operand.vmem [shape: f32[1,4], index: 12, kind: input, shape index: {}]
  %s13 = inlined_call_operand.vmem [shape: f32[1,4], index: 13, kind: input, shape index: {}]
  %s14 = inlined_call_operand.hbm [shape: f32[8,8], index: 14, kind: output, shape index: {}]
  %s15 = sld [smem:[#allocation0]]
  $region66: #{tpu_custom_call.1} parent=0
    _
  %s17 = ssub.s32 1, %s15
  %s18 = scalar_select 0, %s17, %s15
  $region1: #{tpu_custom_call.1} parent=0
    #allocation2 [shape = 'u8[4096]{0}', space=vmem, size = 0x1000, scoped, tag = 'output window, operand 0, single buffered']
    #allocation3 [shape = 's32[1]{0}', space=sflag, size = 0x4, scoped, tag = 'scoped memory for tpu_custom_call.1']
    %19 = vsyncpa [#allocation3], 0
    // Predicated region
    $region2: #{tpu_custom_call.1} parent=1 // pred_check
      _
    $region3: #{tpu_custom_call.1} parent=1 // pred_check_branch
      %21 = sbr.rel (0) target = $region5
    $region4: #{tpu_custom_call.1} parent=1 // pred_region
      _
    $region5: #{tpu_custom_call.1} parent=1 // pred_fallthru
      _
    // Predicated region
    $region6: #{tpu_custom_call.1} parent=1 // pred_check
      _
    $region7: #{tpu_custom_call.1} parent=1 // pred_check_branch
      %23 = sbr.rel (0) target = $region9
    $region8: #{tpu_custom_call.1} parent=1 // pred_region
      _
    $region9: #{tpu_custom_call.1} parent=1 // pred_fallthru
      _
    // Predicated region
    $region10: #{tpu_custom_call.1} parent=1 // pred_check
      _
    $region11: #{tpu_custom_call.1} parent=1 // pred_check_branch
      %25 = sbr.rel (0) target = $region13
    $region12: #{tpu_custom_call.1} parent=1 // pred_region
      _
    $region13: #{tpu_custom_call.1} parent=1 // pred_fallthru
      _
    // Predicated region
    $region14: #{tpu_custom_call.1} parent=1 // pred_check
      _
    $region15: #{tpu_custom_call.1} parent=1 // pred_check_branch
      %27 = sbr.rel (0) target = $region17
    $region16: #{tpu_custom_call.1} parent=1 // pred_region
      _
    $region17: #{tpu_custom_call.1} parent=1 // pred_fallthru
      _
    // Predicated region
    $region18: #{tpu_custom_call.1} parent=1 // pred_check
      _
    $region19: #{tpu_custom_call.1} parent=1 // pred_check_branch
      %29 = sbr.rel (0) target = $region21
    $region20: #{tpu_custom_call.1} parent=1 // pred_region
      _
    $region21: #{tpu_custom_call.1} parent=1 // pred_fallthru
      _
    // Predicated region
    $region22: #{tpu_custom_call.1} parent=1 // pred_check
      _
    $region23: #{tpu_custom_call.1} parent=1 // pred_check_branch
      %31 = sbr.rel (0) target = $region25
    $region24: #{tpu_custom_call.1} parent=1 // pred_region
      _
    $region25: #{tpu_custom_call.1} parent=1 // pred_fallthru
      _
    // Predicated region
    $region26: #{tpu_custom_call.1} parent=1 // pred_check
      _
    $region27: #{tpu_custom_call.1} parent=1 // pred_check_branch
      %33 = sbr.rel (0) target = $region29
    $region28: #{tpu_custom_call.1} parent=1 // pred_region
      _
    $region29: #{tpu_custom_call.1} parent=1 // pred_fallthru
      _
    // Predicated region
    $region30: #{tpu_custom_call.1} parent=1 // pred_check
      _
    $region31: #{tpu_custom_call.1} parent=1 // pred_check_branch
      %35 = sbr.rel (0) target = $region33
    $region32: #{tpu_custom_call.1} parent=1 // pred_region
      _
    $region33: #{tpu_custom_call.1} parent=1 // pred_fallthru
      _
    // Predicated region
    $region34: #{tpu_custom_call.1} parent=1 // pred_check
      _
    $region35: #{tpu_custom_call.1} parent=1 // pred_check_branch
      %37 = sbr.rel (0) target = $region37
    $region36: #{tpu_custom_call.1} parent=1 // pred_region
      _
    $region37: #{tpu_custom_call.1} parent=1 // pred_fallthru
      _
    // Predicated region
    $region38: #{tpu_custom_call.1} parent=1 // pred_check
      _
    $region39: #{tpu_custom_call.1} parent=1 // pred_check_branch
      %39 = sbr.rel (0) target = $region41
    $region40: #{tpu_custom_call.1} parent=1 // pred_region
      _
    $region41: #{tpu_custom_call.1} parent=1 // pred_fallthru
      _
    // Predicated region
    $region42: #{tpu_custom_call.1} parent=1 // pred_check
      _
    $region43: #{tpu_custom_call.1} parent=1 // pred_check_branch
      %41 = sbr.rel (0) target = $region45
    $region44: #{tpu_custom_call.1} parent=1 // pred_region
      _
    $region45: #{tpu_custom_call.1} parent=1 // pred_fallthru
      _
    // Predicated region
    $region46: #{tpu_custom_call.1} parent=1 // pred_check
      _
    $region47: #{tpu_custom_call.1} parent=1 // pred_check_branch
      %43 = sbr.rel (0) target = $region49
    $region48: #{tpu_custom_call.1} parent=1 // pred_region
      _
    $region49: #{tpu_custom_call.1} parent=1 // pred_fallthru
      _
    // Predicated region
    $region50: #{tpu_custom_call.1} parent=1 // pred_check
      _
    $region51: #{tpu_custom_call.1} parent=1 // pred_check_branch
      %45 = sbr.rel (0) target = $region53
    $region52: #{tpu_custom_call.1} parent=1 // pred_region
      _
    $region53: #{tpu_custom_call.1} parent=1 // pred_fallthru
      _
    // Predicated region
    $region54: #{tpu_custom_call.1} parent=1 // pred_check
      _
    $region55: #{tpu_custom_call.1} parent=1 // pred_check_branch
      %47 = sbr.rel (0) target = $region57
    $region56: #{tpu_custom_call.1} parent=1 // pred_region
      _
    $region57: #{tpu_custom_call.1} parent=1 // pred_fallthru
      _
    %v48 = vld [vmem:[%s0] sm:$0xff]
    %v49 = vld [vmem:[%s2] sm:$0xff]
    %v50 = vld [vmem:[%s2 + $0x8] sm:$0xf]
    %v51 = vld [vmem:[%s4] sm:$0xf]
    %52 = vxpose.xlu0.b32.start [1/16] %v51, 128
    %53 = vxpose.xlu0.b32.cont [2/16] 0.0, 128
    %54 = vxpose.xlu0.b32.cont [3/16] 0.0, 128
    %55 = vxpose.xlu0.b32.cont [4/16] 0.0, 128
    %56 = vxpose.xlu0.b32.cont [5/16] 0.0, 128
    %57 = vxpose.xlu0.b32.cont [6/16] 0.0, 128
    %58 = vxpose.xlu0.b32.cont [7/16] 0.0, 128
    %59 = vxpose.xlu0.b32.cont [8/16] 0.0, 128
    %60 = vxpose.xlu0.b32.cont [9/16] 0.0, 128
    %61 = vxpose.xlu0.b32.cont [10/16] 0.0, 128
    %62 = vxpose.xlu0.b32.cont [11/16] 0.0, 128
    %63 = vxpose.xlu0.b32.cont [12/16] 0.0, 128
    %64 = vxpose.xlu0.b32.cont [13/16] 0.0, 128
    %65 = vxpose.xlu0.b32.cont [14/16] 0.0, 128
    %66 = vxpose.xlu0.b32.cont [15/16] 0.0, 128
    %67 = vxpose.xlu0.b32.end [16/16] 0.0, 128
    %v68 = vpop.trf.xlu0
    %v69 = vpop.trf.xlu0
    %v70 = vpop.trf.xlu0
    %v71 = vpop.trf.xlu0
    %v72 = vpop.trf.xlu0
    %v73 = vpop.trf.xlu0
    %v74 = vpop.trf.xlu0
    %v75 = vpop.trf.xlu0
    %v76 = vpop.trf.xlu0
    %v77 = vpop.trf.xlu0
    %v78 = vpop.trf.xlu0
    %v79 = vpop.trf.xlu0
    %v80 = vpop.trf.xlu0
    %v81 = vpop.trf.xlu0
    %v82 = vpop.trf.xlu0
    %v83 = vpop.trf.xlu0
    %v84 = vld [vmem:[%s6] sm:$0xff]
    %v85 = vld [vmem:[%s6 + $0x8] sm:$0xff]
    %v86 = vld [vmem:[%s8] sm:$0xf]
    %v87 = vld [vmem:[%s3] sm:$0x1]
    %v88 = vld [vmem:[%s5] sm:$0x1]
    %v89 = vld [vmem:[%s7] sm:$0x1]
    %v90 = vld [vmem:[%s9] sm:$0x1]
    %v91 = vld [vmem:[%s1] sm:$0x3]
    %93 = vrot.lane.b32.xlu0 %v48, 124
    %v94 = vpop.permute.xlu0 %93
    %v97 = vperm.slane %v87, 0
    %vm99 = vcmask 31744
    %v100 = vsel %vm99, %v48, 0
    %v102 = vsel %vm99, %v94, 0
    %v105 = vsel %vm99, %v49, 0
    %v108 = vsel %vm99, %v50, 0
    %110 = vmatpush.xpose.msra.mxu0 0.0
    %111 = vmatpush.xpose.msra.mxu0 0.0
    %112 = vmatpush.xpose.msra.mxu0 0.0
    %113 = vmatpush.xpose.msra.mxu0 0.0
    %114 = vmatpush.xpose.msra.mxu0 0.0
    %115 = vmatpush.xpose.msra.mxu0 0.0
    %116 = vmatpush.xpose.msra.mxu0 0.0
    %117 = vmatpush.xpose.msra.mxu0 0.0
    %118 = vmatpush.xpose.msra.mxu0 0.0
    %119 = vmatpush.xpose.msra.mxu0 0.0
    %120 = vmatpush.xpose.msra.mxu0 0.0
    %121 = vmatpush.xpose.msra.mxu0 0.0
    %122 = vmatpush.xpose.msra.mxu0 0.0
    %123 = vmatpush.xpose.msra.mxu0 0.0
    %124 = vmatpush.xpose.msra.mxu0 %v108
    %125 = vmatpush.xpose.msra.mxu0 %v105
    %126 = vmatmul.f32.gmra.mxu0 %v100
    %v127 = vpop.f32.mrf.mxu0
    %v128 = vadd.f32 %v97, %v127
    %129 = vmatmul.f32.gmra.mxu0 %v102
    %v130 = vpop.f32.mrf.mxu0
    %v131 = vadd.f32 %v97, %v130
    %132 = vdwg.mxu0
    %134 = vrot.lane.b32.xlu0 %v128, 124
    %v135 = vpop.permute.xlu0 %134
    %vm136 = vcmask 15360
    %v137 = vsel %vm136, %v128, 0
    %v139 = vsel %vm136, %v135, 0
    %141 = vmatpush.xpose.msra.mxu0 0.0
    %142 = vmatpush.xpose.msra.mxu0 0.0
    %143 = vmatpush.xpose.msra.mxu0 0.0
    %144 = vmatpush.xpose.msra.mxu0 0.0
    %145 = vmatpush.xpose.msra.mxu0 0.0
    %146 = vmatpush.xpose.msra.mxu0 0.0
    %147 = vmatpush.xpose.msra.mxu0 0.0
    %148 = vmatpush.xpose.msra.mxu0 0.0
    %149 = vmatpush.xpose.msra.mxu0 0.0
    %150 = vmatpush.xpose.msra.mxu0 0.0
    %151 = vmatpush.xpose.msra.mxu0 0.0
    %152 = vmatpush.xpose.msra.mxu0 0.0
    %153 = vmatpush.xpose.msra.mxu0 0.0
    %154 = vmatpush.xpose.msra.mxu0 0.0
    %155 = vmatpush.xpose.msra.mxu0 0.0
    %156 = vmatpush.xpose.msra.mxu0 %v139
    %157 = vmatmul.f32.gmra.mxu0 %v137
    %v158 = vpop.f32.mrf.mxu0
    %v159 = vadd.f32 0.0, %v158
    %160 = vdwg.mxu0
    %v161 = vmul.f32 %v159, 0.70710677
    %v162 = vperm.slane %v91, 0
    %v163 = vadd.f32 %v161, %v162
    %vm164 = vcmask 64512
    %v165 = vsel %vm164, %v163, -inf
    %166 = vmax.xlane.f32.xlu0 %v165
    %v167 = vpop.xlane.xlu0 %166
    %v168 = vsub.f32 %v163, %v167
    %v169 = vmul.f32 %v168, 1.442695
    %v170 = vpow.pop %v169
    %v171 = vsel %vm164, %v170, 0.0
    %172 = vadd.xlane.f32.xlu0 %v171
    %v173 = vpop.xlane.xlu0 %172
    %v174 = vrcp.pop %v173
    %v175 = vmul.f32 %v173, %v174
    %v176 = vsub.f32 1.0, %v175
    %v177 = vmul.f32 %v174, %v176
    %v178 = vadd.f32 %v174, %v177
    %vm179 = vweird.f32 %v173
    %vm180 = vweird.f32 %v174
    %vm181 = vmor %vm179, %vm180
    %v182 = vsel %vm181, %v174, %v178
    %v183 = vand.u32 2147483647, %v173
    %vm184 = vcmp.eq.f32.partialorder %v183, 8.507059e+37
    %v185 = vand.u32 %v173, 2147483648
    %v186 = vor.u32 1.1754944e-38, %v185
    %v187 = vsel %vm184, %v186, %v182
    %v188 = vmul.f32 %v170, %v187
    %189 = vrot.lane.b32.xlu0 %v128, 120
    %v190 = vpop.permute.xlu0 %189
    %v193 = vsel %vm164, %v188, 0
    %195 = vmatpush.msra.mxu0 0.0
    %196 = vmatpush.msra.mxu0 0.0
    %197 = vmatpush.msra.mxu0 0.0
    %198 = vmatpush.msra.mxu0 0.0
    %199 = vmatpush.msra.mxu0 0.0
    %200 = vmatpush.msra.mxu0 0.0
    %201 = vmatpush.msra.mxu0 0.0
    %202 = vmatpush.msra.mxu0 0.0
    %203 = vmatpush.msra.mxu0 0.0
    %204 = vmatpush.msra.mxu0 0.0
    %205 = vmatpush.msra.mxu0 0.0
    %206 = vmatpush.msra.mxu0 0.0
    %207 = vmatpush.msra.mxu0 0.0
    %208 = vmatpush.msra.mxu0 0.0
    %209 = vmatpush.msra.mxu0 0.0
    %210 = vmatpush.msra.mxu0 %v190
    %211 = vmatmul.f32.gmra.mxu0 %v193
    %v212 = vpop.f32.mrf.mxu0
    %v213 = vadd.f32 0.0, %v212
    %214 = vdwg.mxu0
    %215 = vrot.lane.b32.xlu0 %v128, 126
    %v216 = vpop.permute.xlu0 %215
    %217 = vrot.lane.b32.xlu0 %v128, 122
    %v218 = vpop.permute.xlu0 %217
    %v219 = vsel %vm136, %v216, 0
    %v221 = vsel %vm136, %v218, 0
    %223 = vmatpush.xpose.msra.mxu0 0.0
    %224 = vmatpush.xpose.msra.mxu0 0.0
    %225 = vmatpush.xpose.msra.mxu0 0.0
    %226 = vmatpush.xpose.msra.mxu0 0.0
    %227 = vmatpush.xpose.msra.mxu0 0.0
    %228 = vmatpush.xpose.msra.mxu0 0.0
    %229 = vmatpush.xpose.msra.mxu0 0.0
    %230 = vmatpush.xpose.msra.mxu0 0.0
    %231 = vmatpush.xpose.msra.mxu0 0.0
    %232 = vmatpush.xpose.msra.mxu0 0.0
    %233 = vmatpush.xpose.msra.mxu0 0.0
    %234 = vmatpush.xpose.msra.mxu0 0.0
    %235 = vmatpush.xpose.msra.mxu0 0.0
    %236 = vmatpush.xpose.msra.mxu0 0.0
    %237 = vmatpush.xpose.msra.mxu0 0.0
    %238 = vmatpush.xpose.msra.mxu0 %v221
    %239 = vmatmul.f32.gmra.mxu0 %v219
    %v240 = vpop.f32.mrf.mxu0
    %v241 = vadd.f32 0.0, %v240
    %242 = vdwg.mxu0
    %v243 = vmul.f32 %v241, 0.70710677
    %v244 = vadd.f32 %v243, %v162
    %v245 = vsel %vm164, %v244, -inf
    %246 = vmax.xlane.f32.xlu0 %v245
    %v247 = vpop.xlane.xlu0 %246
    %v248 = vsub.f32 %v244, %v247
    %v249 = vmul.f32 %v248, 1.442695
    %v250 = vpow.pop %v249
    %v251 = vsel %vm164, %v250, 0.0
    %252 = vadd.xlane.f32.xlu0 %v251
    %v253 = vpop.xlane.xlu0 %252
    %v254 = vrcp.pop %v253
    %v255 = vmul.f32 %v253, %v254
    %v256 = vsub.f32 1.0, %v255
    %v257 = vmul.f32 %v254, %v256
    %v258 = vadd.f32 %v254, %v257
    %vm259 = vweird.f32 %v253
    %vm260 = vweird.f32 %v254
    %vm261 = vmor %vm259, %vm260
    %v262 = vsel %vm261, %v254, %v258
    %v263 = vand.u32 2147483647, %v253
    %vm264 = vcmp.eq.f32.partialorder %v263, 8.507059e+37
    %v265 = vand.u32 %v253, 2147483648
    %v266 = vor.u32 1.1754944e-38, %v265
    %v267 = vsel %vm264, %v266, %v262
    %v268 = vmul.f32 %v250, %v267
    %269 = vrot.lane.b32.xlu0 %v128, 118
    %v270 = vpop.permute.xlu0 %269
    %v273 = vsel %vm164, %v268, 0
    %275 = vmatpush.msra.mxu0 0.0
    %276 = vmatpush.msra.mxu0 0.0
    %277 = vmatpush.msra.mxu0 0.0
    %278 = vmatpush.msra.mxu0 0.0
    %279 = vmatpush.msra.mxu0 0.0
    %280 = vmatpush.msra.mxu0 0.0
    %281 = vmatpush.msra.mxu0 0.0
    %282 = vmatpush.msra.mxu0 0.0
    %283 = vmatpush.msra.mxu0 0.0
    %284 = vmatpush.msra.mxu0 0.0
    %285 = vmatpush.msra.mxu0 0.0
    %286 = vmatpush.msra.mxu0 0.0
    %287 = vmatpush.msra.mxu0 0.0
    %288 = vmatpush.msra.mxu0 0.0
    %289 = vmatpush.msra.mxu0 0.0
    %290 = vmatpush.msra.mxu0 %v270
    %291 = vmatmul.f32.gmra.mxu0 %v273
    %v292 = vpop.f32.mrf.mxu0
    %v293 = vadd.f32 0.0, %v292
    %294 = vdwg.mxu0
    %v296 = vrot.slane %v68, 2
    %v298 = vsel %vm136, %v293, 0
    %vm300 = vcmask 1041408
    %v301 = vsel %vm300, %v296, 0
    %303 = vmatpush.msra.mxu0 0.0
    %304 = vmatpush.msra.mxu0 0.0
    %305 = vmatpush.msra.mxu0 0.0
    %306 = vmatpush.msra.mxu0 0.0
    %307 = vmatpush.msra.mxu0 0.0
    %308 = vmatpush.msra.mxu0 0.0
    %309 = vmatpush.msra.mxu0 0.0
    %310 = vmatpush.msra.mxu0 0.0
    %311 = vmatpush.msra.mxu0 0.0
    %312 = vmatpush.msra.mxu0 0.0
    %313 = vmatpush.msra.mxu0 0.0
    %314 = vmatpush.msra.mxu0 0.0
    %315 = vmatpush.msra.mxu0 0.0
    %316 = vmatpush.msra.mxu0 0.0
    %317 = vmatpush.msra.mxu0 0.0
    %318 = vmatpush.msra.mxu0 %v301
    %319 = vmatmul.f32.gmra.mxu0 %v298
    %v320 = vpop.f32.mrf.mxu0
    %v321 = vadd.f32 0.0, %v320
    %322 = vdwg.mxu0
    %v324 = vsel %vm136, %v213, 0
    %v326 = vsel %vm300, %v68, 0
    %328 = vmatpush.msra.mxu0 0.0
    %329 = vmatpush.msra.mxu0 0.0
    %330 = vmatpush.msra.mxu0 0.0
    %331 = vmatpush.msra.mxu0 0.0
    %332 = vmatpush.msra.mxu0 0.0
    %333 = vmatpush.msra.mxu0 0.0
    %334 = vmatpush.msra.mxu0 0.0
    %335 = vmatpush.msra.mxu0 0.0
    %336 = vmatpush.msra.mxu0 0.0
    %337 = vmatpush.msra.mxu0 0.0
    %338 = vmatpush.msra.mxu0 0.0
    %339 = vmatpush.msra.mxu0 0.0
    %340 = vmatpush.msra.mxu0 0.0
    %341 = vmatpush.msra.mxu0 0.0
    %342 = vmatpush.msra.mxu0 0.0
    %343 = vmatpush.msra.mxu0 %v326
    %344 = vmatmul.f32.gmra.mxu0 %v324
    %v345 = vpop.f32.mrf.mxu0
    %v346 = vadd.f32 %v321, %v345
    %347 = vdwg.mxu0
    %349 = vrot.lane.b32.xlu0 %v131, 124
    %v350 = vpop.permute.xlu0 %349
    %v351 = vsel %vm136, %v131, 0
    %v353 = vsel %vm136, %v350, 0
    %355 = vmatpush.xpose.msra.mxu0 0.0
    %356 = vmatpush.xpose.msra.mxu0 0.0
    %357 = vmatpush.xpose.msra.mxu0 0.0
    %358 = vmatpush.xpose.msra.mxu0 0.0
    %359 = vmatpush.xpose.msra.mxu0 0.0
    %360 = vmatpush.xpose.msra.mxu0 0.0
    %361 = vmatpush.xpose.msra.mxu0 0.0
    %362 = vmatpush.xpose.msra.mxu0 0.0
    %363 = vmatpush.xpose.msra.mxu0 0.0
    %364 = vmatpush.xpose.msra.mxu0 0.0
    %365 = vmatpush.xpose.msra.mxu0 0.0
    %366 = vmatpush.xpose.msra.mxu0 0.0
    %367 = vmatpush.xpose.msra.mxu0 0.0
    %368 = vmatpush.xpose.msra.mxu0 0.0
    %369 = vmatpush.xpose.msra.mxu0 0.0
    %370 = vmatpush.xpose.msra.mxu0 %v353
    %371 = vmatmul.f32.gmra.mxu0 %v351
    %v372 = vpop.f32.mrf.mxu0
    %v373 = vadd.f32 0.0, %v372
    %374 = vdwg.mxu0
    %v375 = vmul.f32 %v373, 0.70710677
    %v376 = vperm.slane %v91, 1
    %v377 = vadd.f32 %v375, %v376
    %v378 = vsel %vm164, %v377, -inf
    %379 = vmax.xlane.f32.xlu0 %v378
    %v380 = vpop.xlane.xlu0 %379
    %v381 = vsub.f32 %v377, %v380
    %v382 = vmul.f32 %v381, 1.442695
    %v383 = vpow.pop %v382
    %v384 = vsel %vm164, %v383, 0.0
    %385 = vadd.xlane.f32.xlu0 %v384
    %v386 = vpop.xlane.xlu0 %385
    %v387 = vrcp.pop %v386
    %v388 = vmul.f32 %v386, %v387
    %v389 = vsub.f32 1.0, %v388
    %v390 = vmul.f32 %v387, %v389
    %v391 = vadd.f32 %v387, %v390
    %vm392 = vweird.f32 %v386
    %vm393 = vweird.f32 %v387
    %vm394 = vmor %vm392, %vm393
    %v395 = vsel %vm394, %v387, %v391
    %v396 = vand.u32 2147483647, %v386
    %vm397 = vcmp.eq.f32.partialorder %v396, 8.507059e+37
    %v398 = vand.u32 %v386, 2147483648
    %v399 = vor.u32 1.1754944e-38, %v398
    %v400 = vsel %vm397, %v399, %v395
    %v401 = vmul.f32 %v383, %v400
    %402 = vrot.lane.b32.xlu0 %v131, 120
    %v403 = vpop.permute.xlu0 %402
    %v406 = vsel %vm164, %v401, 0
    %408 = vmatpush.msra.mxu0 0.0
    %409 = vmatpush.msra.mxu0 0.0
    %410 = vmatpush.msra.mxu0 0.0
    %411 = vmatpush.msra.mxu0 0.0
    %412 = vmatpush.msra.mxu0 0.0
    %413 = vmatpush.msra.mxu0 0.0
    %414 = vmatpush.msra.mxu0 0.0
    %415 = vmatpush.msra.mxu0 0.0
    %416 = vmatpush.msra.mxu0 0.0
    %417 = vmatpush.msra.mxu0 0.0
    %418 = vmatpush.msra.mxu0 0.0
    %419 = vmatpush.msra.mxu0 0.0
    %420 = vmatpush.msra.mxu0 0.0
    %421 = vmatpush.msra.mxu0 0.0
    %422 = vmatpush.msra.mxu0 0.0
    %423 = vmatpush.msra.mxu0 %v403
    %424 = vmatmul.f32.gmra.mxu0 %v406
    %v425 = vpop.f32.mrf.mxu0
    %v426 = vadd.f32 0.0, %v425
    %427 = vdwg.mxu0
    %428 = vrot.lane.b32.xlu0 %v131, 126
    %v429 = vpop.permute.xlu0 %428
    %430 = vrot.lane.b32.xlu0 %v131, 122
    %v431 = vpop.permute.xlu0 %430
    %v432 = vsel %vm136, %v429, 0
    %v434 = vsel %vm136, %v431, 0
    %436 = vmatpush.xpose.msra.mxu0 0.0
    %437 = vmatpush.xpose.msra.mxu0 0.0
    %438 = vmatpush.xpose.msra.mxu0 0.0
    %439 = vmatpush.xpose.msra.mxu0 0.0
    %440 = vmatpush.xpose.msra.mxu0 0.0
    %441 = vmatpush.xpose.msra.mxu0 0.0
    %442 = vmatpush.xpose.msra.mxu0 0.0
    %443 = vmatpush.xpose.msra.mxu0 0.0
    %444 = vmatpush.xpose.msra.mxu0 0.0
    %445 = vmatpush.xpose.msra.mxu0 0.0
    %446 = vmatpush.xpose.msra.mxu0 0.0
    %447 = vmatpush.xpose.msra.mxu0 0.0
    %448 = vmatpush.xpose.msra.mxu0 0.0
    %449 = vmatpush.xpose.msra.mxu0 0.0
    %450 = vmatpush.xpose.msra.mxu0 0.0
    %451 = vmatpush.xpose.msra.mxu0 %v434
    %452 = vmatmul.f32.gmra.mxu0 %v432
    %v453 = vpop.f32.mrf.mxu0
    %v454 = vadd.f32 0.0, %v453
    %455 = vdwg.mxu0
    %v456 = vmul.f32 %v454, 0.70710677
    %v457 = vadd.f32 %v456, %v376
    %v458 = vsel %vm164, %v457, -inf
    %459 = vmax.xlane.f32.xlu0 %v458
    %v460 = vpop.xlane.xlu0 %459
    %v461 = vsub.f32 %v457, %v460
    %v462 = vmul.f32 %v461, 1.442695
    %v463 = vpow.pop %v462
    %v464 = vsel %vm164, %v463, 0.0
    %465 = vadd.xlane.f32.xlu0 %v464
    %v466 = vpop.xlane.xlu0 %465
    %v467 = vrcp.pop %v466
    %v468 = vmul.f32 %v466, %v467
    %v469 = vsub.f32 1.0, %v468
    %v470 = vmul.f32 %v467, %v469
    %v471 = vadd.f32 %v467, %v470
    %vm472 = vweird.f32 %v466
    %vm473 = vweird.f32 %v467
    %vm474 = vmor %vm472, %vm473
    %v475 = vsel %vm474, %v467, %v471
    %v476 = vand.u32 2147483647, %v466
    %vm477 = vcmp.eq.f32.partialorder %v476, 8.507059e+37
    %v478 = vand.u32 %v466, 2147483648
    %v479 = vor.u32 1.1754944e-38, %v478
    %v480 = vsel %vm477, %v479, %v475
    %v481 = vmul.f32 %v463, %v480
    %482 = vrot.lane.b32.xlu0 %v131, 118
    %v483 = vpop.permute.xlu0 %482
    %v486 = vsel %vm164, %v481, 0
    %488 = vmatpush.msra.mxu0 0.0
    %489 = vmatpush.msra.mxu0 0.0
    %490 = vmatpush.msra.mxu0 0.0
    %491 = vmatpush.msra.mxu0 0.0
    %492 = vmatpush.msra.mxu0 0.0
    %493 = vmatpush.msra.mxu0 0.0
    %494 = vmatpush.msra.mxu0 0.0
    %495 = vmatpush.msra.mxu0 0.0
    %496 = vmatpush.msra.mxu0 0.0
    %497 = vmatpush.msra.mxu0 0.0
    %498 = vmatpush.msra.mxu0 0.0
    %499 = vmatpush.msra.mxu0 0.0
    %500 = vmatpush.msra.mxu0 0.0
    %501 = vmatpush.msra.mxu0 0.0
    %502 = vmatpush.msra.mxu0 0.0
    %503 = vmatpush.msra.mxu0 %v483
    %504 = vmatmul.f32.gmra.mxu0 %v486
    %v505 = vpop.f32.mrf.mxu0
    %v506 = vadd.f32 0.0, %v505
    %507 = vdwg.mxu0
    %v509 = vsel %vm136, %v506, 0
    %511 = vmatpush.msra.mxu0 0.0
    %512 = vmatpush.msra.mxu0 0.0
    %513 = vmatpush.msra.mxu0 0.0
    %514 = vmatpush.msra.mxu0 0.0
    %515 = vmatpush.msra.mxu0 0.0
    %516 = vmatpush.msra.mxu0 0.0
    %517 = vmatpush.msra.mxu0 0.0
    %518 = vmatpush.msra.mxu0 0.0
    %519 = vmatpush.msra.mxu0 0.0
    %520 = vmatpush.msra.mxu0 0.0
    %521 = vmatpush.msra.mxu0 0.0
    %522 = vmatpush.msra.mxu0 0.0
    %523 = vmatpush.msra.mxu0 0.0
    %524 = vmatpush.msra.mxu0 0.0
    %525 = vmatpush.msra.mxu0 0.0
    %526 = vmatpush.msra.mxu0 %v301
    %527 = vmatmul.f32.gmra.mxu0 %v509
    %v528 = vpop.f32.mrf.mxu0
    %v529 = vadd.f32 0.0, %v528
    %530 = vdwg.mxu0
    %v532 = vsel %vm136, %v426, 0
    %534 = vmatpush.msra.mxu0 0.0
    %535 = vmatpush.msra.mxu0 0.0
    %536 = vmatpush.msra.mxu0 0.0
    %537 = vmatpush.msra.mxu0 0.0
    %538 = vmatpush.msra.mxu0 0.0
    %539 = vmatpush.msra.mxu0 0.0
    %540 = vmatpush.msra.mxu0 0.0
    %541 = vmatpush.msra.mxu0 0.0
    %542 = vmatpush.msra.mxu0 0.0
    %543 = vmatpush.msra.mxu0 0.0
    %544 = vmatpush.msra.mxu0 0.0
    %545 = vmatpush.msra.mxu0 0.0
    %546 = vmatpush.msra.mxu0 0.0
    %547 = vmatpush.msra.mxu0 0.0
    %548 = vmatpush.msra.mxu0 0.0
    %549 = vmatpush.msra.mxu0 %v326
    %550 = vmatmul.f32.gmra.mxu0 %v532
    %v551 = vpop.f32.mrf.mxu0
    %v552 = vadd.f32 %v529, %v551
    %553 = vdwg.mxu0
    %v555 = vperm.slane %v88, 0
    %v557 = vadd.f32 %v346, %v555
    %v558 = vadd.f32 %v552, %v555
    %v559 = vadd.f32 %v48, %v557
    %v560 = vadd.f32 %v94, %v558
    %v561 = vld [vmem:[%s10] sm:$0x1]
    %v562 = vld [vmem:[%s11] sm:$0x1]
    %v563 = vsel %vm99, %v559, 0.0
    %564 = vadd.xlane.f32.xlu0 %v563
    %v565 = vpop.xlane.xlu0 %564
    %v566 = vsel %vm99, %v560, 0.0
    %567 = vadd.xlane.f32.xlu0 %v566
    %v568 = vpop.xlane.xlu0 %567
    %v569 = vrcp.pop 4.0
    %v570 = vmul.f32 4.0, %v569
    %v571 = vsub.f32 1.0, %v570
    %v572 = vmul.f32 %v569, %v571
    %v573 = vadd.f32 %v569, %v572
    %vm574 = vweird.f32 %v569
    %v575 = vsel %vm574, %v569, %v573
    %v576 = vmul.f32 %v565, %v575
    %v577 = vmul.f32 %v568, %v575
    %v578 = vsub.f32 %v559, %v576
    %v579 = vsub.f32 %v560, %v577
    %v580 = vmul.f32 %v578, %v578
    %v581 = vmul.f32 %v579, %v579
    %v582 = vsel %vm99, %v580, 0.0
    %583 = vadd.xlane.f32.xlu0 %v582
    %v584 = vpop.xlane.xlu0 %583
    %v585 = vsel %vm99, %v581, 0.0
    %586 = vadd.xlane.f32.xlu0 %v585
    %v587 = vpop.xlane.xlu0 %586
    %v588 = vmul.f32 %v584, %v575
    %v589 = vmul.f32 %v587, %v575
    %v590 = vadd.f32 %v588, 1e-05
    %v591 = vadd.f32 %v589, 1e-05
    %v592 = vrsqrt.pop %v590
    %v593 = vmul.f32 %v592, %v590
    %v594 = vmul.f32 %v593, %v592
    %v595 = vmul.f32 0.5, %v594
    %v596 = vsub.f32 1.5, %v595
    %v597 = vmul.f32 %v592, %v596
    %vm598 = vweird.f32 %v590
    %vm599 = vweird.f32 %v592
    %vm600 = vmor %vm598, %vm599
    %v601 = vsel %vm600, %v592, %v597
    %v602 = vrsqrt.pop %v591
    %v603 = vmul.f32 %v602, %v591
    %v604 = vmul.f32 %v603, %v602
    %v605 = vmul.f32 0.5, %v604
    %v606 = vsub.f32 1.5, %v605
    %v607 = vmul.f32 %v602, %v606
    %vm608 = vweird.f32 %v591
    %vm609 = vweird.f32 %v602
    %vm610 = vmor %vm608, %vm609
    %v611 = vsel %vm610, %v602, %v607
    %v612 = vmul.f32 %v578, %v601
    %v613 = vmul.f32 %v579, %v611
    %v615 = vperm.slane %v561, 0
    %v617 = vmul.f32 %v612, %v615
    %v618 = vmul.f32 %v613, %v615
    %v620 = vperm.slane %v562, 0
    %v622 = vadd.f32 %v617, %v620
    %v623 = vadd.f32 %v618, %v620
    %v625 = vperm.slane %v89, 0
    %v628 = vsel %vm99, %v622, 0
    %v631 = vsel %vm99, %v623, 0
    %v634 = vsel %vm99, %v84, 0
    %v637 = vsel %vm99, %v85, 0
    %639 = vmatpush.xpose.msra.mxu0 0.0
    %640 = vmatpush.xpose.msra.mxu0 0.0
    %641 = vmatpush.xpose.msra.mxu0 0.0
    %642 = vmatpush.xpose.msra.mxu0 0.0
    %643 = vmatpush.xpose.msra.mxu0 0.0
    %644 = vmatpush.xpose.msra.mxu0 0.0
    %645 = vmatpush.xpose.msra.mxu0 0.0
    %646 = vmatpush.xpose.msra.mxu0 0.0
    %647 = vmatpush.xpose.msra.mxu0 0.0
    %648 = vmatpush.xpose.msra.mxu0 0.0
    %649 = vmatpush.xpose.msra.mxu0 0.0
    %650 = vmatpush.xpose.msra.mxu0 0.0
    %651 = vmatpush.xpose.msra.mxu0 0.0
    %652 = vmatpush.xpose.msra.mxu0 0.0
    %653 = vmatpush.xpose.msra.mxu0 %v637
    %654 = vmatpush.xpose.msra.mxu0 %v634
    %655 = vmatmul.f32.gmra.mxu0 %v628
    %v656 = vpop.f32.mrf.mxu0
    %v657 = vadd.f32 %v625, %v656
    %658 = vmatmul.f32.gmra.mxu0 %v631
    %v659 = vpop.f32.mrf.mxu0
    %v660 = vadd.f32 %v625, %v659
    %661 = vdwg.mxu0
    %v662 = vmax.f32 %v657, 0.0
    %v663 = vmax.f32 %v660, 0.0
    %v665 = vperm.slane %v90, 0
    %vm667 = vcmask 130048
    %v669 = vsel %vm667, %v662, 0
    %v672 = vsel %vm667, %v663, 0
    %v675 = vsel %vm667, %v86, 0
    %677 = vmatpush.xpose.msra.mxu0 0.0
    %678 = vmatpush.xpose.msra.mxu0 0.0
    %679 = vmatpush.xpose.msra.mxu0 0.0
    %680 = vmatpush.xpose.msra.mxu0 0.0
    %681 = vmatpush.xpose.msra.mxu0 0.0
    %682 = vmatpush.xpose.msra.mxu0 0.0
    %683 = vmatpush.xpose.msra.mxu0 0.0
    %684 = vmatpush.xpose.msra.mxu0 0.0
    %685 = vmatpush.xpose.msra.mxu0 0.0
    %686 = vmatpush.xpose.msra.mxu0 0.0
    %687 = vmatpush.xpose.msra.mxu0 0.0
    %688 = vmatpush.xpose.msra.mxu0 0.0
    %689 = vmatpush.xpose.msra.mxu0 0.0
    %690 = vmatpush.xpose.msra.mxu0 0.0
    %691 = vmatpush.xpose.msra.mxu0 0.0
    %692 = vmatpush.xpose.msra.mxu0 %v675
    %693 = vmatmul.f32.gmra.mxu0 %v669
    %v694 = vpop.f32.mrf.mxu0
    %v695 = vadd.f32 %v665, %v694
    %696 = vmatmul.f32.gmra.mxu0 %v672
    %v697 = vpop.f32.mrf.mxu0
    %v698 = vadd.f32 %v665, %v697
    %699 = vdwg.mxu0
    %v700 = vadd.f32 %v622, %v695
    %v701 = vadd.f32 %v623, %v698
    %v702 = vld [vmem:[%s12] sm:$0x1]
    %v703 = vld [vmem:[%s13] sm:$0x1]
    %v704 = vsel %vm99, %v700, 0.0
    %705 = vadd.xlane.f32.xlu0 %v704
    %v706 = vpop.xlane.xlu0 %705
    %v707 = vsel %vm99, %v701, 0.0
    %708 = vadd.xlane.f32.xlu0 %v707
    %v709 = vpop.xlane.xlu0 %708
    %v710 = vmul.f32 %v706, %v575
    %v711 = vmul.f32 %v709, %v575
    %v712 = vsub.f32 %v700, %v710
    %v713 = vsub.f32 %v701, %v711
    %v714 = vmul.f32 %v712, %v712
    %v715 = vmul.f32 %v713, %v713
    %v716 = vsel %vm99, %v714, 0.0
    %717 = vadd.xlane.f32.xlu0 %v716
    %v718 = vpop.xlane.xlu0 %717
    %v719 = vsel %vm99, %v715, 0.0
    %720 = vadd.xlane.f32.xlu0 %v719
    %v721 = vpop.xlane.xlu0 %720
    %v722 = vmul.f32 %v718, %v575
    %v723 = vmul.f32 %v721, %v575
    %v724 = vadd.f32 %v722, 1e-05
    %v725 = vadd.f32 %v723, 1e-05
    %v726 = vrsqrt.pop %v724
    %v727 = vmul.f32 %v726, %v724
    %v728 = vmul.f32 %v727, %v726
    %v729 = vmul.f32 0.5, %v728
    %v730 = vsub.f32 1.5, %v729
    %v731 = vmul.f32 %v726, %v730
    %vm732 = vweird.f32 %v724
    %vm733 = vweird.f32 %v726
    %vm734 = vmor %vm732, %vm733
    %v735 = vsel %vm734, %v726, %v731
    %v736 = vrsqrt.pop %v725
    %v737 = vmul.f32 %v736, %v725
    %v738 = vmul.f32 %v737, %v736
    %v739 = vmul.f32 0.5, %v738
    %v740 = vsub.f32 1.5, %v739
    %v741 = vmul.f32 %v736, %v740
    %vm742 = vweird.f32 %v725
    %vm743 = vweird.f32 %v736
    %vm744 = vmor %vm742, %vm743
    %v745 = vsel %vm744, %v736, %v741
    %v746 = vmul.f32 %v712, %v735
    %v747 = vmul.f32 %v713, %v745
    %v749 = vperm.slane %v702, 0
    %v751 = vmul.f32 %v746, %v749
    %v752 = vmul.f32 %v747, %v749
    %v754 = vperm.slane %v703, 0
    %v756 = vadd.f32 %v751, %v754
    %v757 = vadd.f32 %v752, %v754
    %759 = vrot.lane.b32.xlu0 %v757, 4
    %v760 = vpop.permute.xlu0 %759
    %v762 = vsel %vm99, %v756, %v760
    %763 = vst.msk [vmem:[#allocation2] sm:$0xff] %vm164, %v762
    // Predicated region
    $region58: #{tpu_custom_call.1} parent=1 // pred_check
      _
    $region59: #{tpu_custom_call.1} parent=1 // pred_check_branch
      %765 = sbr.rel (0) target = $region61
    $region60: #{tpu_custom_call.1} parent=1 // pred_region
      %767 = vsyncadd [#allocation3], 0
      %s769 = sshll.u32 [#allocation2], 4
      %s770 = int_to_ptr.vmem [resolvable:$true] %s769
      %s771 = sshll.u32 %s14, 4
      %s772 = int_to_ptr.hbm [resolvable:$true] %s771
      %774 = dma.vmem_to_hbm [thread:$0]  %s770, 128, %s772, [#allocation3]
    $region61: #{tpu_custom_call.1} parent=1 // pred_fallthru
      _
    // Predicated region
    $region62: #{tpu_custom_call.1} parent=1 // pred_check
      _
    $region63: #{tpu_custom_call.1} parent=1 // pred_check_branch
      %776 = sbr.rel (0) target = $region65
    $region64: #{tpu_custom_call.1} parent=1 // pred_region
      %778 = dma.done [#allocation3], 128
    $region65: #{tpu_custom_call.1} parent=1 // pred_fallthru
      _
    %779 = vsyncpa [#allocation3], 1

</llo_original>
